<compile_context>
chip_gen: v5e
topology: v5e:2x2
jax: 0.10.0
libtpu: 0.0.40
codegen_flags: <defaults>
</compile_context>

<pallas_src>
import functools

import jax
import jax.numpy as jnp
from jax.experimental import pallas as pl
from jax.experimental.pallas import tpu as pltpu

BN_EPS = 1e-5
LANE = 128


def _round_up(n, m):
    return ((n + m - 1) // m) * m


def _bn_relu(h, gamma, beta, inv_b):
    """Training-mode BatchNorm1d folded to one scale/shift per feature, + ReLU.

    Single-pass statistics: mean = sum(h)/B, var = sum(h*h)/B - mean^2
    (clamped at 0 for cancellation safety). h: (B, F) f32; gamma/beta: (1, F).
    """
    s1 = jnp.sum(h, axis=0, keepdims=True)
    s2 = jnp.sum(h * h, axis=0, keepdims=True)
    mean = s1 * inv_b
    var = jnp.maximum(s2 * inv_b - mean * mean, 0.0)
    s = gamma * jax.lax.rsqrt(var + BN_EPS)        # per-feature, rsqrt -> EUP
    shift = beta - mean * s
    return jnp.maximum(h * s + shift, 0.0)         # one mul + one add per elem


def smallfcn_kernel(x_ref, w1_ref, w2_ref, w3_ref, aff_ref, o_ref,
                    *, h1p, h2p, ncp, inv_b):
    # Static lane slices of the coalesced affine slab (zero-cost ref views).
    g1 = aff_ref[:, 0:h1p]
    be1 = aff_ref[:, h1p:2 * h1p]
    g2 = aff_ref[:, 2 * h1p:2 * h1p + h2p]
    be2 = aff_ref[:, 2 * h1p + h2p:2 * h1p + 2 * h2p]
    b3 = aff_ref[:, 2 * h1p + 2 * h2p:2 * h1p + 2 * h2p + ncp]

    # fc1 (bias dropped: exactly cancelled by BN mean subtraction) + bn1 + relu.
    # x arrives as f32; cast to bf16 right at the MXU boundary.
    h1 = jnp.dot(x_ref[...].astype(jnp.bfloat16), w1_ref[...],
                 preferred_element_type=jnp.float32)
    h1 = _bn_relu(h1, g1, be1, inv_b)

    # fc2 + bn2 + relu (bf16 only on the MXU operands; BN/ReLU stay f32).
    h2 = jnp.dot(h1.astype(jnp.bfloat16), w2_ref[...],
                 preferred_element_type=jnp.float32)
    h2 = _bn_relu(h2, g2, be2, inv_b)

    # Final linear (bias kept; output is a lane-dense 128-wide slab).
    o_ref[...] = jnp.dot(h2.astype(jnp.bfloat16), w3_ref[...],
                         preferred_element_type=jnp.float32) + b3


def prepare_params(params):
    """One-time weight prep: drop dead fc1/fc2 biases, zero-pad feature dims to
    lane (128) multiples, cast matmul weights to bf16, and coalesce the five
    per-feature f32 vectors (g1, be1, g2, be2, b3) into one slab."""
    (w1, _b1, g1, be1, w2, _b2, g2, be2, w3, b3) = params
    h1 = w1.shape[1]
    h2 = w2.shape[1]
    nc = w3.shape[1]
    h1p, h2p, ncp = _round_up(h1, LANE), _round_up(h2, LANE), _round_up(nc, LANE)

    w1p = jnp.pad(w1, ((0, 0), (0, h1p - h1))).astype(jnp.bfloat16)
    w2p = jnp.pad(w2, ((0, h1p - h1), (0, h2p - h2))).astype(jnp.bfloat16)
    w3p = jnp.pad(w3, ((0, h2p - h2), (0, ncp - nc))).astype(jnp.bfloat16)

    aff = jnp.concatenate(
        [jnp.pad(g1, ((0, 0), (0, h1p - h1))),
         jnp.pad(be1, ((0, 0), (0, h1p - h1))),
         jnp.pad(g2, ((0, 0), (0, h2p - h2))),
         jnp.pad(be2, ((0, 0), (0, h2p - h2))),
         jnp.pad(b3, ((0, 0), (0, ncp - nc)))],
        axis=1).astype(jnp.float32)                # (1, 2*h1p + 2*h2p + ncp)

    return (w1p, w2p, w3p, aff)


@functools.partial(jax.jit, static_argnames=("num_classes", "batch_per_step"))
def smallfcn_forward(x_nchw, prepped, *, num_classes, batch_per_step):
    """x_nchw: (NB*batch_per_step, C, H, W) f32. Each consecutive group of
    `batch_per_step` samples is one independent SmallFCN forward (its own
    training-mode BN statistics). Returns logits (NB*batch_per_step, nc) f32."""
    total = x_nchw.shape[0]
    assert total % batch_per_step == 0
    nb = total // batch_per_step

    # Same flattening order as torch .view(B, -1); stays f32 (free reshape).
    x_flat = x_nchw.reshape(total, -1)

    (w1, w2, w3, aff) = prepped
    d_in, h1p = w1.shape
    h2p = w2.shape[1]
    ncp = w3.shape[1]
    aff_len = aff.shape[1]
    bps = batch_per_step

    flops = nb * (2 * bps * (d_in * h1p + h1p * h2p + h2p * ncp)
                  + 8 * bps * (h1p + h2p))
    bytes_accessed = (x_flat.size * 4
                      + (w1.size + w2.size + w3.size) * 2
                      + aff.size * 4
                      + total * ncp * 4)

    kernel = functools.partial(smallfcn_kernel, h1p=h1p, h2p=h2p, ncp=ncp,
                               inv_b=1.0 / bps)

    out_padded = pl.pallas_call(
        kernel,
        out_shape=jax.ShapeDtypeStruct((total, ncp), jnp.float32),
        grid=(nb,),
        in_specs=[
            # Streams with the auto double-buffer.
            pl.BlockSpec((bps, d_in), lambda b: (b, 0)),
            # Constant block index -> DMA'd once, VMEM-resident for all steps.
            pl.BlockSpec((d_in, h1p), lambda b: (0, 0)),
            pl.BlockSpec((h1p, h2p), lambda b: (0, 0)),
            pl.BlockSpec((h2p, ncp), lambda b: (0, 0)),
            pl.BlockSpec((1, aff_len), lambda b: (0, 0)),
        ],
        out_specs=pl.BlockSpec((bps, ncp), lambda b: (b, 0)),
        compiler_params=pltpu.CompilerParams(
            dimension_semantics=("parallel",),     # megacore split on v7x
            vmem_limit_bytes=4 << 20),
        cost_estimate=pl.CostEstimate(
            flops=flops, transcendentals=nb * (h1p + h2p),
            bytes_accessed=bytes_accessed),
    )(x_flat, w1, w2, w3, aff)

    return out_padded[:, :num_classes]


def make_params(key, input_shape=(16, 16, 3), alpha=4, num_classes=10):
    """Deterministic params mirroring the PyTorch module's shapes.

    Linear weights generated in PyTorch (out, in) convention, transposed to
    (in, out) for row-major matmuls. Biases b1/b2 are generated (to mirror the
    module and to verify in the reference that dropping them is exact) but are
    not passed to the kernel.
    """
    image_s = input_shape[0]
    input_size = input_shape[0] * input_shape[1] * input_shape[2]
    h1 = image_s * image_s * alpha // 4
    h2 = 24 * alpha

    ks = jax.random.split(key, 10)

    def linear(kw, kb, fan_in, fan_out):
        bound = 1.0 / jnp.sqrt(fan_in)
        w = jax.random.uniform(kw, (fan_out, fan_in), jnp.float32, -bound, bound)
        b = jax.random.uniform(kb, (1, fan_out), jnp.float32, -bound, bound)
        return w.T, b  # (in, out), (1, out)

    w1, b1 = linear(ks[0], ks[1], input_size, h1)
    w2, b2 = linear(ks[2], ks[3], h1, h2)
    w3, b3 = linear(ks[4], ks[5], h2, num_classes)

    g1 = 1.0 + 0.1 * jax.random.normal(ks[6], (1, h1), jnp.float32)
    be1 = 0.1 * jax.random.normal(ks[7], (1, h1), jnp.float32)
    g2 = 1.0 + 0.1 * jax.random.normal(ks[8], (1, h2), jnp.float32)
    be2 = 0.1 * jax.random.normal(ks[9], (1, h2), jnp.float32)

    return (w1, b1, g1, be1, w2, b2, g2, be2, w3, b3)


def reference_forward(x_nchw, params, batch_per_step, matmul_dtype=jnp.float32):
    """Pure-JAX reference with full PyTorch semantics (biases included,
    unfolded two-pass BN), applied independently to each micro-batch of
    `batch_per_step` samples. `matmul_dtype` controls MXU operand precision so
    the same function serves as an exact-math check (bf16) and as the f32
    module reference."""
    (w1, b1, g1, be1, w2, b2, g2, be2, w3, b3) = params

    def mm(a, w):
        return jnp.dot(a.astype(matmul_dtype), w.astype(matmul_dtype),
                       preferred_element_type=jnp.float32)

    def bn(h, g, be):
        m = jnp.mean(h, axis=0, keepdims=True)
        v = jnp.mean((h - m) ** 2, axis=0, keepdims=True)
        return g * (h - m) / jnp.sqrt(v + BN_EPS) + be

    outs = []
    total = x_nchw.shape[0]
    for i in range(0, total, batch_per_step):
        x = x_nchw[i:i + batch_per_step].reshape(batch_per_step, -1)
        h = jnp.maximum(bn(mm(x, w1) + b1, g1, be1), 0.0)
        h = jnp.maximum(bn(mm(h, w2) + b2, g2, be2), 0.0)
        outs.append(mm(h, w3) + b3)
    return jnp.concatenate(outs, axis=0)


if __name__ == "__main__":
    # Shapes consistent with the module: input_shape=(16,16,3), alpha=4
    #  -> input_size=768, hidden1=256, hidden2=96, num_classes=10.
    # 4 micro-batches of 8 samples each (BN statistics per micro-batch).
    input_shape = (16, 16, 3)
    alpha = 4
    num_classes = 10
    batch_per_step = 8
    num_batches = 4
    total = num_batches * batch_per_step

    key = jax.random.PRNGKey(0)
    k_param, k_x = jax.random.split(key)

    params = make_params(k_param, input_shape, alpha, num_classes)
    prepped = prepare_params(params)

    # NCHW input, like PyTorch.
    x = jax.random.normal(
        k_x, (total, input_shape[2], input_shape[0], input_shape[1]),
        dtype=jnp.float32)

    out = jax.block_until_ready(
        smallfcn_forward(x, prepped, num_classes=num_classes,
                         batch_per_step=batch_per_step))
    assert out.shape == (total, num_classes)

    # 1) Kernel correctness: reference using the same bf16-operand / f32-acc
    #    matmul math (biases included -> verifies they cancel exactly under BN;
    #    two-pass variance -> verifies the one-pass rewrite).
    ref_bf16 = jax.block_until_ready(
        reference_forward(x, params, batch_per_step, jnp.bfloat16))
    assert jnp.allclose(out, ref_bf16, atol=5e-3, rtol=5e-3), \
        "mismatch vs bf16-matmul reference"

    # 2) Semantic fidelity vs the full-f32 PyTorch-style forward; the only
    #    deviation is the bf16 MXU operand rounding.
    ref_f32 = jax.block_until_ready(
        reference_forward(x, params, batch_per_step, jnp.float32))
    assert jnp.allclose(out, ref_f32, atol=8e-2, rtol=8e-2), \
        "mismatch vs f32 reference"

    print("KERNEL_OK")
</pallas_src>

<mosaic_0001>
module attributes {stable_mosaic.version = 11 : i64} {
  func.func @smallfcn_kernel(%arg0: i32, %arg1: memref<8x768xf32, #tpu.memory_space<vmem>>, %arg2: memref<768x256xbf16, #tpu.memory_space<vmem>>, %arg3: memref<256x128xbf16, #tpu.memory_space<vmem>>, %arg4: memref<128x128xbf16, #tpu.memory_space<vmem>>, %arg5: memref<1x896xf32, #tpu.memory_space<vmem>>, %arg6: memref<8x128xf32, #tpu.memory_space<vmem>>) attributes {dimension_semantics = [#tpu.dimension_semantics<parallel>], iteration_bounds = array<i64: 4>, scalar_prefetch = 0 : i64, scratch_operands = 0 : i64, tpu.core_type = #tpu.core_type<tc>, window_params = [{transform_indices = @transform_0, window_bounds = array<i64: 8, 768>}, {pipeline_mode = #tpu.pipeline_mode<synchronous>, transform_indices = @transform_1, window_bounds = array<i64: 768, 256>}, {pipeline_mode = #tpu.pipeline_mode<synchronous>, transform_indices = @transform_2, window_bounds = array<i64: 256, 128>}, {pipeline_mode = #tpu.pipeline_mode<synchronous>, transform_indices = @transform_3, window_bounds = array<i64: 128, 128>}, {pipeline_mode = #tpu.pipeline_mode<synchronous>, transform_indices = @transform_4, window_bounds = array<i64: 1, 896>}, {transform_indices = @transform_5, window_bounds = array<i64: 8, 128>}]} {
    %c0 = arith.constant 0 : index
    %c0_0 = arith.constant 0 : index
    %0 = vector.load %arg5[%c0, %c0_0] : memref<1x896xf32, #tpu.memory_space<vmem>>, vector<1x256xf32>
    %c0_1 = arith.constant 0 : index
    %c256 = arith.constant 256 : index
    %1 = vector.load %arg5[%c0_1, %c256] : memref<1x896xf32, #tpu.memory_space<vmem>>, vector<1x256xf32>
    %c0_2 = arith.constant 0 : index
    %c512 = arith.constant 512 : index
    %2 = vector.load %arg5[%c0_2, %c512] : memref<1x896xf32, #tpu.memory_space<vmem>>, vector<1x128xf32>
    %c0_3 = arith.constant 0 : index
    %c640 = arith.constant 640 : index
    %3 = vector.load %arg5[%c0_3, %c640] : memref<1x896xf32, #tpu.memory_space<vmem>>, vector<1x128xf32>
    %c0_4 = arith.constant 0 : index
    %c768 = arith.constant 768 : index
    %4 = vector.load %arg5[%c0_4, %c768] : memref<1x896xf32, #tpu.memory_space<vmem>>, vector<1x128xf32>
    %c0_5 = arith.constant 0 : index
    %c0_6 = arith.constant 0 : index
    %5 = vector.load %arg1[%c0_5, %c0_6] : memref<8x768xf32, #tpu.memory_space<vmem>>, vector<8x768xf32>
    %6 = arith.truncf %5 : vector<8x768xf32> to vector<8x768xbf16>
    %c0_7 = arith.constant 0 : index
    %c0_8 = arith.constant 0 : index
    %7 = vector.load %arg2[%c0_7, %c0_8] : memref<768x256xbf16, #tpu.memory_space<vmem>>, vector<768x256xbf16>
    %cst = arith.constant dense<0.000000e+00> : vector<8x256xf32>
    %8 = tpu.matmul %6, %7, %cst {dimension_numbers = #tpu.dot_dimension_numbers<[1], [0], [0], [1], [0, 0, 1, 1], [], []>} : vector<8x768xbf16>, vector<768x256xbf16>, vector<8x256xf32> -> vector<8x256xf32>
    %cst_9 = arith.constant dense<0.000000e+00> : vector<256xf32>
    %9 = vector.multi_reduction <add>, %8, %cst_9 [0] : vector<8x256xf32> to vector<256xf32>
    %10 = vector.shape_cast %9 : vector<256xf32> to vector<1x256xf32>
    %11 = arith.mulf %8, %8 : vector<8x256xf32>
    %cst_10 = arith.constant dense<0.000000e+00> : vector<256xf32>
    %12 = vector.multi_reduction <add>, %11, %cst_10 [0] : vector<8x256xf32> to vector<256xf32>
    %13 = vector.shape_cast %12 : vector<256xf32> to vector<1x256xf32>
    %cst_11 = arith.constant 1.250000e-01 : f32
    %14 = vector.broadcast %cst_11 : f32 to vector<1x256xf32>
    %15 = arith.mulf %10, %14 : vector<1x256xf32>
    %cst_12 = arith.constant 1.250000e-01 : f32
    %16 = vector.broadcast %cst_12 : f32 to vector<1x256xf32>
    %17 = arith.mulf %13, %16 : vector<1x256xf32>
    %18 = arith.mulf %15, %15 : vector<1x256xf32>
    %19 = arith.subf %17, %18 : vector<1x256xf32>
    %cst_13 = arith.constant 0.000000e+00 : f32
    %20 = vector.broadcast %cst_13 : f32 to vector<1x256xf32>
    %21 = arith.maximumf %19, %20 : vector<1x256xf32>
    %cst_14 = arith.constant 9.99999974E-6 : f32
    %22 = vector.broadcast %cst_14 : f32 to vector<1x256xf32>
    %23 = arith.addf %21, %22 : vector<1x256xf32>
    %24 = math.rsqrt %23 : vector<1x256xf32>
    %25 = arith.mulf %0, %24 : vector<1x256xf32>
    %26 = arith.mulf %15, %25 : vector<1x256xf32>
    %27 = arith.subf %1, %26 : vector<1x256xf32>
    %28 = vector.broadcast %25 : vector<1x256xf32> to vector<8x256xf32>
    %29 = arith.mulf %8, %28 : vector<8x256xf32>
    %30 = vector.broadcast %27 : vector<1x256xf32> to vector<8x256xf32>
    %31 = arith.addf %29, %30 : vector<8x256xf32>
    %cst_15 = arith.constant 0.000000e+00 : f32
    %32 = vector.broadcast %cst_15 : f32 to vector<8x256xf32>
    %33 = arith.maximumf %31, %32 : vector<8x256xf32>
    %34 = arith.truncf %33 : vector<8x256xf32> to vector<8x256xbf16>
    %c0_16 = arith.constant 0 : index
    %c0_17 = arith.constant 0 : index
    %35 = vector.load %arg3[%c0_16, %c0_17] : memref<256x128xbf16, #tpu.memory_space<vmem>>, vector<256x128xbf16>
    %cst_18 = arith.constant dense<0.000000e+00> : vector<8x128xf32>
    %36 = tpu.matmul %34, %35, %cst_18 {dimension_numbers = #tpu.dot_dimension_numbers<[1], [0], [0], [1], [0, 0, 1, 1], [], []>} : vector<8x256xbf16>, vector<256x128xbf16>, vector<8x128xf32> -> vector<8x128xf32>
    %cst_19 = arith.constant dense<0.000000e+00> : vector<128xf32>
    %37 = vector.multi_reduction <add>, %36, %cst_19 [0] : vector<8x128xf32> to vector<128xf32>
    %38 = vector.shape_cast %37 : vector<128xf32> to vector<1x128xf32>
    %39 = arith.mulf %36, %36 : vector<8x128xf32>
    %cst_20 = arith.constant dense<0.000000e+00> : vector<128xf32>
    %40 = vector.multi_reduction <add>, %39, %cst_20 [0] : vector<8x128xf32> to vector<128xf32>
    %41 = vector.shape_cast %40 : vector<128xf32> to vector<1x128xf32>
    %cst_21 = arith.constant 1.250000e-01 : f32
    %42 = vector.broadcast %cst_21 : f32 to vector<1x128xf32>
    %43 = arith.mulf %38, %42 : vector<1x128xf32>
    %cst_22 = arith.constant 1.250000e-01 : f32
    %44 = vector.broadcast %cst_22 : f32 to vector<1x128xf32>
    %45 = arith.mulf %41, %44 : vector<1x128xf32>
    %46 = arith.mulf %43, %43 : vector<1x128xf32>
    %47 = arith.subf %45, %46 : vector<1x128xf32>
    %cst_23 = arith.constant 0.000000e+00 : f32
    %48 = vector.broadcast %cst_23 : f32 to vector<1x128xf32>
    %49 = arith.maximumf %47, %48 : vector<1x128xf32>
    %cst_24 = arith.constant 9.99999974E-6 : f32
    %50 = vector.broadcast %cst_24 : f32 to vector<1x128xf32>
    %51 = arith.addf %49, %50 : vector<1x128xf32>
    %52 = math.rsqrt %51 : vector<1x128xf32>
    %53 = arith.mulf %2, %52 : vector<1x128xf32>
    %54 = arith.mulf %43, %53 : vector<1x128xf32>
    %55 = arith.subf %3, %54 : vector<1x128xf32>
    %56 = vector.broadcast %53 : vector<1x128xf32> to vector<8x128xf32>
    %57 = arith.mulf %36, %56 : vector<8x128xf32>
    %58 = vector.broadcast %55 : vector<1x128xf32> to vector<8x128xf32>
    %59 = arith.addf %57, %58 : vector<8x128xf32>
    %cst_25 = arith.constant 0.000000e+00 : f32
    %60 = vector.broadcast %cst_25 : f32 to vector<8x128xf32>
    %61 = arith.maximumf %59, %60 : vector<8x128xf32>
    %62 = arith.truncf %61 : vector<8x128xf32> to vector<8x128xbf16>
    %c0_26 = arith.constant 0 : index
    %c0_27 = arith.constant 0 : index
    %63 = vector.load %arg4[%c0_26, %c0_27] : memref<128x128xbf16, #tpu.memory_space<vmem>>, vector<128x128xbf16>
    %cst_28 = arith.constant dense<0.000000e+00> : vector<8x128xf32>
    %64 = tpu.matmul %62, %63, %cst_28 {dimension_numbers = #tpu.dot_dimension_numbers<[1], [0], [0], [1], [0, 0, 1, 1], [], []>} : vector<8x128xbf16>, vector<128x128xbf16>, vector<8x128xf32> -> vector<8x128xf32>
    %65 = vector.broadcast %4 : vector<1x128xf32> to vector<8x128xf32>
    %66 = arith.addf %64, %65 : vector<8x128xf32>
    %c0_29 = arith.constant 0 : index
    %c0_30 = arith.constant 0 : index
    %67 = vector.load %arg6[%c0_29, %c0_30] : memref<8x128xf32, #tpu.memory_space<vmem>>, vector<8x128xf32>
    tpu.vector_store %arg6[%c0_29, %c0_30], %66 {strides = array<i32>} : memref<8x128xf32, #tpu.memory_space<vmem>>, vector<8x128xf32>,
    return
  }
  func.func @transform_0(%arg0: i32) -> (i32, i32) {
    %c0_i32 = arith.constant 0 : i32
    %c0_i32_0 = arith.constant 0 : i32
    return %arg0, %c0_i32 : i32, i32
  }
  func.func @transform_1(%arg0: i32) -> (i32, i32) {
    %c0_i32 = arith.constant 0 : i32
    %c0_i32_0 = arith.constant 0 : i32
    %c0_i32_1 = arith.constant 0 : i32
    return %c0_i32, %c0_i32_0 : i32, i32
  }
  func.func @transform_2(%arg0: i32) -> (i32, i32) {
    %c0_i32 = arith.constant 0 : i32
    %c0_i32_0 = arith.constant 0 : i32
    %c0_i32_1 = arith.constant 0 : i32
    return %c0_i32, %c0_i32_0 : i32, i32
  }
  func.func @transform_3(%arg0: i32) -> (i32, i32) {
    %c0_i32 = arith.constant 0 : i32
    %c0_i32_0 = arith.constant 0 : i32
    %c0_i32_1 = arith.constant 0 : i32
    return %c0_i32, %c0_i32_0 : i32, i32
  }
  func.func @transform_4(%arg0: i32) -> (i32, i32) {
    %c0_i32 = arith.constant 0 : i32
    %c0_i32_0 = arith.constant 0 : i32
    %c0_i32_1 = arith.constant 0 : i32
    return %c0_i32, %c0_i32_0 : i32, i32
  }
  func.func @transform_5(%arg0: i32) -> (i32, i32) {
    %c0_i32 = arith.constant 0 : i32
    %c0_i32_0 = arith.constant 0 : i32
    return %arg0, %c0_i32 : i32, i32
  }
}

</mosaic_0001>

<llo_original>
// kernel: smallfcn_forward.1
$region0: #{smallfcn_forward.1}
  #allocation0 [shape = 'u32[]', space=smem, size = 0x4, offset = 0x4, fixed_abs, tag = 'smem constant byte address 0x4 - core index']
  #allocation1 [shape = 'u32[72,128]{1,0:T(1,128)}', space=vmem, size = 0x9000, scoped, tag = 'internal scratch']
  %s0 = inlined_call_operand.vmem [shape: f32[32,768], index: 0, kind: input, shape index: {}]
  %s1 = inlined_call_operand.vmem [shape: bf16[768,256], index: 1, kind: input, shape index: {}]
  %s2 = inlined_call_operand.vmem [shape: bf16[256,128], index: 2, kind: input, shape index: {}]
  %s3 = inlined_call_operand.vmem [shape: bf16[128,128], index: 3, kind: input, shape index: {}]
  %s4 = inlined_call_operand.hbm [shape: f32[1,896], index: 4, kind: input, shape index: {}]
  %s5 = inlined_call_operand.vmem [shape: f32[32,128], index: 5, kind: output, shape index: {}]
  %s6 = sld [smem:[#allocation0]]
  $region57: #{smallfcn_forward.1} parent=0
    _
  %s8 = ssub.s32 1, %s6
  %s9 = scalar_select 0, %s8, %s6
  $region1: #{smallfcn_forward.1} parent=0
    #allocation2 [shape = 'u8[3584]{0}', space=vmem, size = 0x1000, scoped, tag = 'input window, operand 4, single buffered']
    #allocation3 [shape = 's32[2]{0}', space=sflag, size = 0x8, scoped, tag = 'scoped memory for smallfcn_forward.1']
    %10 = vsyncpa [#allocation3], 0
    loop: start=0, step=1, limit=6
    $region2: #{smallfcn_forward.1} parent=1 // loop_pre_header
      _
    $region3: #{smallfcn_forward.1} parent=1 // loop_header
      %s12 = sphi 0, %s16
      %p13 = scmp.ge.s32.totalorder %s12, 6
      %s22 = sphi 0, %s24
      %s25 = sphi 0, %s22
      %s26 = sphi 0, %s25
      %s42 = sphi 0, %s26
      %s46 = sphi 0, %s46
      %s48 = sphi 0, %s46
      %s49 = sphi 0, %s48
      %s63 = sphi 0, %s49
      %s67 = sphi 0, %s67
      %s69 = sphi 0, %s67
      %s70 = sphi 0, %s69
      %s84 = sphi 0, %s70
      %s88 = sphi 0, %s88
      %s90 = sphi 0, %s88
      %s91 = sphi 0, %s90
      %s105 = sphi 0, %s91
      %s109 = sphi 0, %s109
      %s111 = sphi 0, %s109
      %s112 = sphi 0, %s111
      %s126 = sphi 0, %s112
      %s132 = sphi 0, %s134
      %s135 = sphi 0, %s132
      %s136 = sphi 0, %s135
      %s152 = sphi 0, %s136
    $region4: #{smallfcn_forward.1} parent=1 // loop_header_branch
      %15 = sbr.rel (%p13) target = $region8
    $region5: #{smallfcn_forward.1} parent=1 // loop_body
      %s17 = ssub.s32 %s12, 1
      %s18 = ssub.s32 %s12, 2
      %s19 = sadd.s32 %s12, 1
      %s20 = ssub.s32 %s12, %s19
      %p21 = scmp.eq.s32.totalorder %s20, 0
      %s23 = sadd.s32 %s22, 1
      %s24 = scalar_select %p21, %s22, %s23
      %p27 = pneg %p21
      %p28 = scmp.eq.s32.totalorder %s12, 3
      %p29 = por %p27, %p28
      %p30 = scmp.ne.s32.totalorder %s22, %s25
      %p31 = scmp.eq.s32.totalorder %s12, 0
      %p32 = por %p30, %p31
      %p33 = scmp.ne.s32.totalorder %s22, %s25
      %p34 = scmp.eq.s32.totalorder %s17, 3
      %p35 = por %p33, %p34
      %p36 = scmp.ne.s32.totalorder %s25, %s26
      %p37 = scmp.eq.s32.totalorder %s17, 0
      %p38 = por %p36, %p37
      %p39 = scmp.ne.s32.totalorder %s25, %s26
      %p40 = scmp.eq.s32.totalorder %s18, 3
      %p41 = por %p39, %p40
      %p43 = scmp.ne.s32.totalorder %s26, %s42
      %p44 = scmp.eq.s32.totalorder %s18, 0
      %p45 = por %p43, %p44
      %s47 = sadd.s32 %s46, 1
      %p50 = scmp.eq.s32.totalorder %s12, 3
      %p51 = scmp.ne.s32.totalorder %s46, %s48
      %p52 = scmp.eq.s32.totalorder %s12, 0
      %p53 = por %p51, %p52
      %p54 = scmp.ne.s32.totalorder %s46, %s48
      %p55 = scmp.eq.s32.totalorder %s17, 3
      %p56 = por %p54, %p55
      %p57 = scmp.ne.s32.totalorder %s48, %s49
      %p58 = scmp.eq.s32.totalorder %s17, 0
      %p59 = por %p57, %p58
      %p60 = scmp.ne.s32.totalorder %s48, %s49
      %p61 = scmp.eq.s32.totalorder %s18, 3
      %p62 = por %p60, %p61
      %p64 = scmp.ne.s32.totalorder %s49, %s63
      %p65 = scmp.eq.s32.totalorder %s18, 0
      %p66 = por %p64, %p65
      %s68 = sadd.s32 %s67, 1
      %p71 = scmp.eq.s32.totalorder %s12, 3
      %p72 = scmp.ne.s32.totalorder %s67, %s69
      %p73 = scmp.eq.s32.totalorder %s12, 0
      %p74 = por %p72, %p73
      %p75 = scmp.ne.s32.totalorder %s67, %s69
      %p76 = scmp.eq.s32.totalorder %s17, 3
      %p77 = por %p75, %p76
      %p78 = scmp.ne.s32.totalorder %s69, %s70
      %p79 = scmp.eq.s32.totalorder %s17, 0
      %p80 = por %p78, %p79
      %p81 = scmp.ne.s32.totalorder %s69, %s70
      %p82 = scmp.eq.s32.totalorder %s18, 3
      %p83 = por %p81, %p82
      %p85 = scmp.ne.s32.totalorder %s70, %s84
      %p86 = scmp.eq.s32.totalorder %s18, 0
      %p87 = por %p85, %p86
      %s89 = sadd.s32 %s88, 1
      %p92 = scmp.eq.s32.totalorder %s12, 3
      %p93 = scmp.ne.s32.totalorder %s88, %s90
      %p94 = scmp.eq.s32.totalorder %s12, 0
      %p95 = por %p93, %p94
      %p96 = scmp.ne.s32.totalorder %s88, %s90
      %p97 = scmp.eq.s32.totalorder %s17, 3
      %p98 = por %p96, %p97
      %p99 = scmp.ne.s32.totalorder %s90, %s91
      %p100 = scmp.eq.s32.totalorder %s17, 0
      %p101 = por %p99, %p100
      %p102 = scmp.ne.s32.totalorder %s90, %s91
      %p103 = scmp.eq.s32.totalorder %s18, 3
      %p104 = por %p102, %p103
      %p106 = scmp.ne.s32.totalorder %s91, %s105
      %p107 = scmp.eq.s32.totalorder %s18, 0
      %p108 = por %p106, %p107
      %s110 = sadd.s32 %s109, 1
      %p113 = scmp.eq.s32.totalorder %s12, 3
      %p114 = scmp.ne.s32.totalorder %s109, %s111
      %p115 = scmp.eq.s32.totalorder %s12, 0
      %p116 = por %p114, %p115
      %p117 = scmp.ne.s32.totalorder %s109, %s111
      %p118 = scmp.eq.s32.totalorder %s17, 3
      %p119 = por %p117, %p118
      %p120 = scmp.ne.s32.totalorder %s111, %s112
      %p121 = scmp.eq.s32.totalorder %s17, 0
      %p122 = por %p120, %p121
      %p123 = scmp.ne.s32.totalorder %s111, %s112
      %p124 = scmp.eq.s32.totalorder %s18, 3
      %p125 = por %p123, %p124
      %p127 = scmp.ne.s32.totalorder %s112, %s126
      %p128 = scmp.eq.s32.totalorder %s18, 0
      %p129 = por %p127, %p128
      %s130 = ssub.s32 %s12, %s19
      %p131 = scmp.eq.s32.totalorder %s130, 0
      %s133 = sadd.s32 %s132, 1
      %s134 = scalar_select %p131, %s132, %s133
      %p137 = pneg %p131
      %p138 = scmp.eq.s32.totalorder %s12, 3
      %p139 = por %p137, %p138
      %p140 = scmp.ne.s32.totalorder %s132, %s135
      %p141 = scmp.eq.s32.totalorder %s12, 0
      %p142 = por %p140, %p141
      %p143 = scmp.ne.s32.totalorder %s132, %s135
      %p144 = scmp.eq.s32.totalorder %s17, 3
      %p145 = por %p143, %p144
      %p146 = scmp.ne.s32.totalorder %s135, %s136
      %p147 = scmp.eq.s32.totalorder %s17, 0
      %p148 = por %p146, %p147
      %p149 = scmp.ne.s32.totalorder %s135, %s136
      %p150 = scmp.eq.s32.totalorder %s18, 3
      %p151 = por %p149, %p150
      %p153 = scmp.ne.s32.totalorder %s136, %s152
      %p154 = scmp.eq.s32.totalorder %s18, 0
      %p155 = por %p153, %p154
      %p156 = scmp.le.s32.totalorder 1, %s12
      %p157 = scmp.lt.s32.totalorder %s12, 5
      %p158 = pnand %p156, %p157
      %p159 = pneg %p158
      // Predicated region
      $region9: #{smallfcn_forward.1} parent=5 // pred_check
        _
      $region10: #{smallfcn_forward.1} parent=5 // pred_check_branch
        %161 = sbr.rel (%p158) target = $region12
      $region11: #{smallfcn_forward.1} parent=5 // pred_region
        %s162 = ssub.s32 %s12, 1
        // Predicated region
        $region13: #{smallfcn_forward.1} parent=11 // pred_check
          %p163 = pneg %p59
        $region14: #{smallfcn_forward.1} parent=11 // pred_check_branch
          %165 = sbr.rel (%p163) target = $region16
        $region15: #{smallfcn_forward.1} parent=11 // pred_region
          _
        $region16: #{smallfcn_forward.1} parent=11 // pred_fallthru
          _
        // Predicated region
        $region17: #{smallfcn_forward.1} parent=11 // pred_check
          %p166 = pneg %p80
        $region18: #{smallfcn_forward.1} parent=11 // pred_check_branch
          %168 = sbr.rel (%p166) target = $region20
        $region19: #{smallfcn_forward.1} parent=11 // pred_region
          _
        $region20: #{smallfcn_forward.1} parent=11 // pred_fallthru
          _
        // Predicated region
        $region21: #{smallfcn_forward.1} parent=11 // pred_check
          %p169 = pneg %p101
        $region22: #{smallfcn_forward.1} parent=11 // pred_check_branch
          %171 = sbr.rel (%p169) target = $region24
        $region23: #{smallfcn_forward.1} parent=11 // pred_region
          _
        $region24: #{smallfcn_forward.1} parent=11 // pred_fallthru
          _
        // Predicated region
        $region25: #{smallfcn_forward.1} parent=11 // pred_check
          %p172 = pneg %p122
        $region26: #{smallfcn_forward.1} parent=11 // pred_check_branch
          %174 = sbr.rel (%p172) target = $region28
        $region27: #{smallfcn_forward.1} parent=11 // pred_region
          %176 = vsyncadd [#allocation3], 0
          %s178 = sshll.u32 %s4, 4
          %s179 = int_to_ptr.hbm [resolvable:$true] %s178
          %s180 = sshll.u32 [#allocation2], 4
          %s181 = int_to_ptr.vmem [resolvable:$true] %s180
          %183 = dma.hbm_to_vmem [thread:$0]  %s179, 112, %s181, [#allocation3]
        $region28: #{smallfcn_forward.1} parent=11 // pred_fallthru
          _
      $region12: #{smallfcn_forward.1} parent=5 // pred_fallthru
        _
      %p184 = scmp.lt.s32.totalorder %s12, 4
      // Predicated region
      $region29: #{smallfcn_forward.1} parent=5 // pred_check
        %p185 = pneg %p184
      $region30: #{smallfcn_forward.1} parent=5 // pred_check_branch
        %187 = sbr.rel (%p185) target = $region32
      $region31: #{smallfcn_forward.1} parent=5 // pred_region
        // Predicated region
        $region33: #{smallfcn_forward.1} parent=31 // pred_check
          %p188 = pneg %p32
        $region34: #{smallfcn_forward.1} parent=31 // pred_check_branch
          %190 = sbr.rel (%p188) target = $region36
        $region35: #{smallfcn_forward.1} parent=31 // pred_region
          %p191 = scmp.lt.s32.totalorder %s12, 3
          %s192 = scalar_select %p191, %s12, 3
          %s193 = smul.addr %s192, 6
          %s194 = smul.addr %s193, 8
          %s195 = scalar_lea.vmem %s0, %s194
        $region36: #{smallfcn_forward.1} parent=31 // pred_fallthru
          _
      $region32: #{smallfcn_forward.1} parent=5 // pred_fallthru
        _
      %p196 = scmp.le.s32.totalorder 1, %s12
      %p197 = scmp.lt.s32.totalorder %s12, 5
      %p198 = pnand %p196, %p197
      %p199 = pneg %p198
      // Predicated region
      $region37: #{smallfcn_forward.1} parent=5 // pred_check
        _
      $region38: #{smallfcn_forward.1} parent=5 // pred_check_branch
        %201 = sbr.rel (%p198) target = $region40
      $region39: #{smallfcn_forward.1} parent=5 // pred_region
        %s202 = ssub.s32 %s12, 1
        // Predicated region
        $region41: #{smallfcn_forward.1} parent=39 // pred_check
          %p203 = pneg %p122
        $region42: #{smallfcn_forward.1} parent=39 // pred_check_branch
          %205 = sbr.rel (%p203) target = $region44
        $region43: #{smallfcn_forward.1} parent=39 // pred_region
          %207 = dma.done [#allocation3], 112
        $region44: #{smallfcn_forward.1} parent=39 // pred_fallthru
          _
        %p208 = scmp.lt.s32.totalorder %s17, 3
        %s209 = scalar_select %p208, %s17, 3
        %s210 = smul.addr %s209, 6
        %s211 = smul.addr %s210, 8
        %s212 = scalar_lea.vmem %s0, %s211
        %p213 = pneg %p38
        %p214 = pneg %p35
        %p215 = pneg %p59
        %p216 = pneg %p56
        %p217 = pneg %p80
        %p218 = pneg %p77
        %p219 = pneg %p101
        %p220 = pneg %p98
        %p221 = pneg %p122
        %p222 = pneg %p119
        %p223 = pneg %p148
        %p224 = pneg %p145
        %p225 = scmp.lt.s32.totalorder %s17, 3
        %s226 = scalar_select %p225, %s17, 3
        %s227 = smul.addr %s226, 8
        %s228 = scalar_lea.vmem %s5, %s227
        %p229 = scmp.lt.s32.totalorder %s17, 3
        %s230 = scalar_select %p229, %s17, 3
        %s231 = smul.addr %s230, 6
        %s232 = smul.addr %s231, 8
        %s233 = scalar_lea.vmem %s0, %s232
        %p234 = scmp.lt.s32.totalorder %s17, 3
        %s235 = scalar_select %p234, %s17, 3
        %s236 = smul.addr %s235, 8
        %s237 = scalar_lea.vmem %s5, %s236
        %v238 = vld [vmem:[#allocation2] sm:$0x3]
        %v239 = vld [vmem:[#allocation2 + $0x2] sm:$0x3]
        %v240 = vld [vmem:[#allocation2 + $0x4] sm:$0x1]
        %v241 = vld [vmem:[#allocation2 + $0x5] sm:$0x1]
        %v242 = vld [vmem:[#allocation2 + $0x6] sm:$0x1]
        %v243 = vld [vmem:[%s233] sm:$0xff]
        %v244 = vld [vmem:[%s233 + $0x8] sm:$0xff]
        %v245 = vld [vmem:[%s233 + $0x10] sm:$0xff]
        %v246 = vld [vmem:[%s233 + $0x18] sm:$0xff]
        %v247 = vld [vmem:[%s233 + $0x20] sm:$0xff]
        %v248 = vld [vmem:[%s233 + $0x28] sm:$0xff]
        %v249 = vpack.c.bf16 %v243, %v243
        %v250 = vpack.c.bf16 %v244, %v244
        %v251 = vpack.c.bf16 %v245, %v245
        %v252 = vpack.c.bf16 %v246, %v246
        %v253 = vpack.c.bf16 %v247, %v247
        %v254 = vpack.c.bf16 %v248, %v248
        %v255 = vld [vmem:[%s1] sm:$0xff]
        %v256 = vld [vmem:[%s1 + $0x8] sm:$0xff]
        %v257 = vld [vmem:[%s1 + $0x10] sm:$0xff]
        %v258 = vld [vmem:[%s1 + $0x18] sm:$0xff]
        %v259 = vld [vmem:[%s1 + $0x20] sm:$0xff]
        %v260 = vld [vmem:[%s1 + $0x28] sm:$0xff]
        %v261 = vld [vmem:[%s1 + $0x30] sm:$0xff]
        %v262 = vld [vmem:[%s1 + $0x38] sm:$0xff]
        %v263 = vld [vmem:[%s1 + $0x40] sm:$0xff]
        %v264 = vld [vmem:[%s1 + $0x48] sm:$0xff]
        %v265 = vld [vmem:[%s1 + $0x50] sm:$0xff]
        %v266 = vld [vmem:[%s1 + $0x58] sm:$0xff]
        %v267 = vld [vmem:[%s1 + $0x60] sm:$0xff]
        %v268 = vld [vmem:[%s1 + $0x68] sm:$0xff]
        %v269 = vld [vmem:[%s1 + $0x70] sm:$0xff]
        %v270 = vld [vmem:[%s1 + $0x78] sm:$0xff]
        %v271 = vld [vmem:[%s1 + $0x80] sm:$0xff]
        %v272 = vld [vmem:[%s1 + $0x88] sm:$0xff]
        %v273 = vld [vmem:[%s1 + $0x90] sm:$0xff]
        %v274 = vld [vmem:[%s1 + $0x98] sm:$0xff]
        %v275 = vld [vmem:[%s1 + $0xa0] sm:$0xff]
        %v276 = vld [vmem:[%s1 + $0xa8] sm:$0xff]
        %v277 = vld [vmem:[%s1 + $0xb0] sm:$0xff]
        %v278 = vld [vmem:[%s1 + $0xb8] sm:$0xff]
        %v279 = vld [vmem:[%s1 + $0xc0] sm:$0xff]
        %v280 = vld [vmem:[%s1 + $0xc8] sm:$0xff]
        %v281 = vld [vmem:[%s1 + $0xd0] sm:$0xff]
        %v282 = vld [vmem:[%s1 + $0xd8] sm:$0xff]
        %v283 = vld [vmem:[%s1 + $0xe0] sm:$0xff]
        %v284 = vld [vmem:[%s1 + $0xe8] sm:$0xff]
        %v285 = vld [vmem:[%s1 + $0xf0] sm:$0xff]
        %v286 = vld [vmem:[%s1 + $0xf8] sm:$0xff]
        %v287 = vld [vmem:[%s1 + $0x100] sm:$0xff]
        %v288 = vld [vmem:[%s1 + $0x108] sm:$0xff]
        %v289 = vld [vmem:[%s1 + $0x110] sm:$0xff]
        %v290 = vld [vmem:[%s1 + $0x118] sm:$0xff]
        %v291 = vld [vmem:[%s1 + $0x120] sm:$0xff]
        %v292 = vld [vmem:[%s1 + $0x128] sm:$0xff]
        %v293 = vld [vmem:[%s1 + $0x130] sm:$0xff]
        %v294 = vld [vmem:[%s1 + $0x138] sm:$0xff]
        %v295 = vld [vmem:[%s1 + $0x140] sm:$0xff]
        %v296 = vld [vmem:[%s1 + $0x148] sm:$0xff]
        %v297 = vld [vmem:[%s1 + $0x150] sm:$0xff]
        %v298 = vld [vmem:[%s1 + $0x158] sm:$0xff]
        %v299 = vld [vmem:[%s1 + $0x160] sm:$0xff]
        %v300 = vld [vmem:[%s1 + $0x168] sm:$0xff]
        %v301 = vld [vmem:[%s1 + $0x170] sm:$0xff]
        %v302 = vld [vmem:[%s1 + $0x178] sm:$0xff]
        %v303 = vld [vmem:[%s1 + $0x180] sm:$0xff]
        %v304 = vld [vmem:[%s1 + $0x188] sm:$0xff]
        %v305 = vld [vmem:[%s1 + $0x190] sm:$0xff]
        %v306 = vld [vmem:[%s1 + $0x198] sm:$0xff]
        %v307 = vld [vmem:[%s1 + $0x1a0] sm:$0xff]
        %v308 = vld [vmem:[%s1 + $0x1a8] sm:$0xff]
        %v309 = vld [vmem:[%s1 + $0x1b0] sm:$0xff]
        %v310 = vld [vmem:[%s1 + $0x1b8] sm:$0xff]
        %v311 = vld [vmem:[%s1 + $0x1c0] sm:$0xff]
        %v312 = vld [vmem:[%s1 + $0x1c8] sm:$0xff]
        %v313 = vld [vmem:[%s1 + $0x1d0] sm:$0xff]
        %v314 = vld [vmem:[%s1 + $0x1d8] sm:$0xff]
        %v315 = vld [vmem:[%s1 + $0x1e0] sm:$0xff]
        %v316 = vld [vmem:[%s1 + $0x1e8] sm:$0xff]
        %v317 = vld [vmem:[%s1 + $0x1f0] sm:$0xff]
        %v318 = vld [vmem:[%s1 + $0x1f8] sm:$0xff]
        %v319 = vld [vmem:[%s1 + $0x200] sm:$0xff]
        %v320 = vld [vmem:[%s1 + $0x208] sm:$0xff]
        %v321 = vld [vmem:[%s1 + $0x210] sm:$0xff]
        %v322 = vld [vmem:[%s1 + $0x218] sm:$0xff]
        %v323 = vld [vmem:[%s1 + $0x220] sm:$0xff]
        %v324 = vld [vmem:[%s1 + $0x228] sm:$0xff]
        %v325 = vld [vmem:[%s1 + $0x230] sm:$0xff]
        %v326 = vld [vmem:[%s1 + $0x238] sm:$0xff]
        %v327 = vld [vmem:[%s1 + $0x240] sm:$0xff]
        %v328 = vld [vmem:[%s1 + $0x248] sm:$0xff]
        %v329 = vld [vmem:[%s1 + $0x250] sm:$0xff]
        %v330 = vld [vmem:[%s1 + $0x258] sm:$0xff]
        %v331 = vld [vmem:[%s1 + $0x260] sm:$0xff]
        %v332 = vld [vmem:[%s1 + $0x268] sm:$0xff]
        %v333 = vld [vmem:[%s1 + $0x270] sm:$0xff]
        %v334 = vld [vmem:[%s1 + $0x278] sm:$0xff]
        %v335 = vld [vmem:[%s1 + $0x280] sm:$0xff]
        %v336 = vld [vmem:[%s1 + $0x288] sm:$0xff]
        %v337 = vld [vmem:[%s1 + $0x290] sm:$0xff]
        %v338 = vld [vmem:[%s1 + $0x298] sm:$0xff]
        %v339 = vld [vmem:[%s1 + $0x2a0] sm:$0xff]
        %v340 = vld [vmem:[%s1 + $0x2a8] sm:$0xff]
        %v341 = vld [vmem:[%s1 + $0x2b0] sm:$0xff]
        %v342 = vld [vmem:[%s1 + $0x2b8] sm:$0xff]
        %v343 = vld [vmem:[%s1 + $0x2c0] sm:$0xff]
        %v344 = vld [vmem:[%s1 + $0x2c8] sm:$0xff]
        %v345 = vld [vmem:[%s1 + $0x2d0] sm:$0xff]
        %v346 = vld [vmem:[%s1 + $0x2d8] sm:$0xff]
        %v347 = vld [vmem:[%s1 + $0x2e0] sm:$0xff]
        %v348 = vld [vmem:[%s1 + $0x2e8] sm:$0xff]
        %v349 = vld [vmem:[%s1 + $0x2f0] sm:$0xff]
        %v350 = vld [vmem:[%s1 + $0x2f8] sm:$0xff]
        %v447 = vunpack.c.l.b16 %v255
        %v448 = vunpack.c.h.b16 %v255
        %v449 = vunpack.c.l.b16 %v256
        %v450 = vunpack.c.h.b16 %v256
        %v451 = vunpack.c.l.b16 %v257
        %v452 = vunpack.c.h.b16 %v257
        %v453 = vunpack.c.l.b16 %v258
        %v454 = vunpack.c.h.b16 %v258
        %v455 = vunpack.c.l.b16 %v259
        %v456 = vunpack.c.h.b16 %v259
        %v457 = vunpack.c.l.b16 %v260
        %v458 = vunpack.c.h.b16 %v260
        %v459 = vunpack.c.l.b16 %v261
        %v460 = vunpack.c.h.b16 %v261
        %v461 = vunpack.c.l.b16 %v262
        %v462 = vunpack.c.h.b16 %v262
        %v463 = vunpack.c.l.b16 %v263
        %v464 = vunpack.c.h.b16 %v263
        %v465 = vunpack.c.l.b16 %v264
        %v466 = vunpack.c.h.b16 %v264
        %v467 = vunpack.c.l.b16 %v265
        %v468 = vunpack.c.h.b16 %v265
        %v469 = vunpack.c.l.b16 %v266
        %v470 = vunpack.c.h.b16 %v266
        %v471 = vunpack.c.l.b16 %v267
        %v472 = vunpack.c.h.b16 %v267
        %v473 = vunpack.c.l.b16 %v268
        %v474 = vunpack.c.h.b16 %v268
        %v475 = vunpack.c.l.b16 %v269
        %v476 = vunpack.c.h.b16 %v269
        %v477 = vunpack.c.l.b16 %v270
        %v478 = vunpack.c.h.b16 %v270
        %v479 = vunpack.c.l.b16 %v271
        %v480 = vunpack.c.h.b16 %v271
        %v481 = vunpack.c.l.b16 %v272
        %v482 = vunpack.c.h.b16 %v272
        %v483 = vunpack.c.l.b16 %v273
        %v484 = vunpack.c.h.b16 %v273
        %v485 = vunpack.c.l.b16 %v274
        %v486 = vunpack.c.h.b16 %v274
        %v487 = vunpack.c.l.b16 %v275
        %v488 = vunpack.c.h.b16 %v275
        %v489 = vunpack.c.l.b16 %v276
        %v490 = vunpack.c.h.b16 %v276
        %v491 = vunpack.c.l.b16 %v277
        %v492 = vunpack.c.h.b16 %v277
        %v493 = vunpack.c.l.b16 %v278
        %v494 = vunpack.c.h.b16 %v278
        %v495 = vunpack.c.l.b16 %v279
        %v496 = vunpack.c.h.b16 %v279
        %v497 = vunpack.c.l.b16 %v280
        %v498 = vunpack.c.h.b16 %v280
        %v499 = vunpack.c.l.b16 %v281
        %v500 = vunpack.c.h.b16 %v281
        %v501 = vunpack.c.l.b16 %v282
        %v502 = vunpack.c.h.b16 %v282
        %v503 = vunpack.c.l.b16 %v283
        %v504 = vunpack.c.h.b16 %v283
        %v505 = vunpack.c.l.b16 %v284
        %v506 = vunpack.c.h.b16 %v284
        %v507 = vunpack.c.l.b16 %v285
        %v508 = vunpack.c.h.b16 %v285
        %v509 = vunpack.c.l.b16 %v286
        %v510 = vunpack.c.h.b16 %v286
        %v511 = vunpack.c.l.b16 %v287
        %v512 = vunpack.c.h.b16 %v287
        %v513 = vunpack.c.l.b16 %v288
        %v514 = vunpack.c.h.b16 %v288
        %v515 = vunpack.c.l.b16 %v289
        %v516 = vunpack.c.h.b16 %v289
        %v517 = vunpack.c.l.b16 %v290
        %v518 = vunpack.c.h.b16 %v290
        %v519 = vunpack.c.l.b16 %v291
        %v520 = vunpack.c.h.b16 %v291
        %v521 = vunpack.c.l.b16 %v292
        %v522 = vunpack.c.h.b16 %v292
        %v523 = vunpack.c.l.b16 %v293
        %v524 = vunpack.c.h.b16 %v293
        %v525 = vunpack.c.l.b16 %v294
        %v526 = vunpack.c.h.b16 %v294
        %v527 = vunpack.c.l.b16 %v295
        %v528 = vunpack.c.h.b16 %v295
        %v529 = vunpack.c.l.b16 %v296
        %v530 = vunpack.c.h.b16 %v296
        %v531 = vunpack.c.l.b16 %v297
        %v532 = vunpack.c.h.b16 %v297
        %v533 = vunpack.c.l.b16 %v298
        %v534 = vunpack.c.h.b16 %v298
        %v535 = vunpack.c.l.b16 %v299
        %v536 = vunpack.c.h.b16 %v299
        %v537 = vunpack.c.l.b16 %v300
        %v538 = vunpack.c.h.b16 %v300
        %v539 = vunpack.c.l.b16 %v301
        %v540 = vunpack.c.h.b16 %v301
        %v541 = vunpack.c.l.b16 %v302
        %v542 = vunpack.c.h.b16 %v302
        %v543 = vunpack.c.l.b16 %v303
        %v544 = vunpack.c.h.b16 %v303
        %v545 = vunpack.c.l.b16 %v304
        %v546 = vunpack.c.h.b16 %v304
        %v547 = vunpack.c.l.b16 %v305
        %v548 = vunpack.c.h.b16 %v305
        %v549 = vunpack.c.l.b16 %v306
        %v550 = vunpack.c.h.b16 %v306
        %v551 = vunpack.c.l.b16 %v307
        %v552 = vunpack.c.h.b16 %v307
        %v553 = vunpack.c.l.b16 %v308
        %v554 = vunpack.c.h.b16 %v308
        %v555 = vunpack.c.l.b16 %v309
        %v556 = vunpack.c.h.b16 %v309
        %v557 = vunpack.c.l.b16 %v310
        %v558 = vunpack.c.h.b16 %v310
        %v559 = vunpack.c.l.b16 %v311
        %v560 = vunpack.c.h.b16 %v311
        %v561 = vunpack.c.l.b16 %v312
        %v562 = vunpack.c.h.b16 %v312
        %v563 = vunpack.c.l.b16 %v313
        %v564 = vunpack.c.h.b16 %v313
        %v565 = vunpack.c.l.b16 %v314
        %v566 = vunpack.c.h.b16 %v314
        %v567 = vunpack.c.l.b16 %v315
        %v568 = vunpack.c.h.b16 %v315
        %v569 = vunpack.c.l.b16 %v316
        %v570 = vunpack.c.h.b16 %v316
        %v571 = vunpack.c.l.b16 %v317
        %v572 = vunpack.c.h.b16 %v317
        %v573 = vunpack.c.l.b16 %v318
        %v574 = vunpack.c.h.b16 %v318
        %v575 = vunpack.c.l.b16 %v319
        %v576 = vunpack.c.h.b16 %v319
        %v577 = vunpack.c.l.b16 %v320
        %v578 = vunpack.c.h.b16 %v320
        %v579 = vunpack.c.l.b16 %v321
        %v580 = vunpack.c.h.b16 %v321
        %v581 = vunpack.c.l.b16 %v322
        %v582 = vunpack.c.h.b16 %v322
        %v583 = vunpack.c.l.b16 %v323
        %v584 = vunpack.c.h.b16 %v323
        %v585 = vunpack.c.l.b16 %v324
        %v586 = vunpack.c.h.b16 %v324
        %v587 = vunpack.c.l.b16 %v325
        %v588 = vunpack.c.h.b16 %v325
        %v589 = vunpack.c.l.b16 %v326
        %v590 = vunpack.c.h.b16 %v326
        %v591 = vunpack.c.l.b16 %v327
        %v592 = vunpack.c.h.b16 %v327
        %v593 = vunpack.c.l.b16 %v328
        %v594 = vunpack.c.h.b16 %v328
        %v595 = vunpack.c.l.b16 %v329
        %v596 = vunpack.c.h.b16 %v329
        %v597 = vunpack.c.l.b16 %v330
        %v598 = vunpack.c.h.b16 %v330
        %v599 = vunpack.c.l.b16 %v331
        %v600 = vunpack.c.h.b16 %v331
        %v601 = vunpack.c.l.b16 %v332
        %v602 = vunpack.c.h.b16 %v332
        %v603 = vunpack.c.l.b16 %v333
        %v604 = vunpack.c.h.b16 %v333
        %v605 = vunpack.c.l.b16 %v334
        %v606 = vunpack.c.h.b16 %v334
        %v607 = vunpack.c.l.b16 %v335
        %v608 = vunpack.c.h.b16 %v335
        %v609 = vunpack.c.l.b16 %v336
        %v610 = vunpack.c.h.b16 %v336
        %v611 = vunpack.c.l.b16 %v337
        %v612 = vunpack.c.h.b16 %v337
        %v613 = vunpack.c.l.b16 %v338
        %v614 = vunpack.c.h.b16 %v338
        %v615 = vunpack.c.l.b16 %v339
        %v616 = vunpack.c.h.b16 %v339
        %v617 = vunpack.c.l.b16 %v340
        %v618 = vunpack.c.h.b16 %v340
        %v619 = vunpack.c.l.b16 %v341
        %v620 = vunpack.c.h.b16 %v341
        %v621 = vunpack.c.l.b16 %v342
        %v622 = vunpack.c.h.b16 %v342
        %v623 = vunpack.c.l.b16 %v343
        %v624 = vunpack.c.h.b16 %v343
        %v625 = vunpack.c.l.b16 %v344
        %v626 = vunpack.c.h.b16 %v344
        %v627 = vunpack.c.l.b16 %v345
        %v628 = vunpack.c.h.b16 %v345
        %v629 = vunpack.c.l.b16 %v346
        %v630 = vunpack.c.h.b16 %v346
        %v631 = vunpack.c.l.b16 %v347
        %v632 = vunpack.c.h.b16 %v347
        %v633 = vunpack.c.l.b16 %v348
        %v634 = vunpack.c.h.b16 %v348
        %v635 = vunpack.c.l.b16 %v349
        %v636 = vunpack.c.h.b16 %v349
        %v637 = vunpack.c.l.b16 %v350
        %v638 = vunpack.c.h.b16 %v350
        %v639 = vpack.c.b16 %v449, %v447
        %v640 = vpack.c.b16 %v450, %v448
        %v641 = vpack.c.b16 %v453, %v451
        %v642 = vpack.c.b16 %v454, %v452
        %v643 = vpack.c.b16 %v457, %v455
        %v644 = vpack.c.b16 %v458, %v456
        %v645 = vpack.c.b16 %v461, %v459
        %v646 = vpack.c.b16 %v462, %v460
        %v647 = vpack.c.b16 %v465, %v463
        %v648 = vpack.c.b16 %v466, %v464
        %v649 = vpack.c.b16 %v469, %v467
        %v650 = vpack.c.b16 %v470, %v468
        %v651 = vpack.c.b16 %v473, %v471
        %v652 = vpack.c.b16 %v474, %v472
        %v653 = vpack.c.b16 %v477, %v475
        %v654 = vpack.c.b16 %v478, %v476
        %v655 = vpack.c.b16 %v481, %v479
        %v656 = vpack.c.b16 %v482, %v480
        %v657 = vpack.c.b16 %v485, %v483
        %v658 = vpack.c.b16 %v486, %v484
        %v659 = vpack.c.b16 %v489, %v487
        %v660 = vpack.c.b16 %v490, %v488
        %v661 = vpack.c.b16 %v493, %v491
        %v662 = vpack.c.b16 %v494, %v492
        %v663 = vpack.c.b16 %v497, %v495
        %v664 = vpack.c.b16 %v498, %v496
        %v665 = vpack.c.b16 %v501, %v499
        %v666 = vpack.c.b16 %v502, %v500
        %v667 = vpack.c.b16 %v505, %v503
        %v668 = vpack.c.b16 %v506, %v504
        %v669 = vpack.c.b16 %v509, %v507
        %v670 = vpack.c.b16 %v510, %v508
        %v671 = vpack.c.b16 %v513, %v511
        %v672 = vpack.c.b16 %v514, %v512
        %v673 = vpack.c.b16 %v517, %v515
        %v674 = vpack.c.b16 %v518, %v516
        %v675 = vpack.c.b16 %v521, %v519
        %v676 = vpack.c.b16 %v522, %v520
        %v677 = vpack.c.b16 %v525, %v523
        %v678 = vpack.c.b16 %v526, %v524
        %v679 = vpack.c.b16 %v529, %v527
        %v680 = vpack.c.b16 %v530, %v528
        %v681 = vpack.c.b16 %v533, %v531
        %v682 = vpack.c.b16 %v534, %v532
        %v683 = vpack.c.b16 %v537, %v535
        %v684 = vpack.c.b16 %v538, %v536
        %v685 = vpack.c.b16 %v541, %v539
        %v686 = vpack.c.b16 %v542, %v540
        %v687 = vpack.c.b16 %v545, %v543
        %v688 = vpack.c.b16 %v546, %v544
        %v689 = vpack.c.b16 %v549, %v547
        %v690 = vpack.c.b16 %v550, %v548
        %v691 = vpack.c.b16 %v553, %v551
        %v692 = vpack.c.b16 %v554, %v552
        %v693 = vpack.c.b16 %v557, %v555
        %v694 = vpack.c.b16 %v558, %v556
        %v695 = vpack.c.b16 %v561, %v559
        %v696 = vpack.c.b16 %v562, %v560
        %v697 = vpack.c.b16 %v565, %v563
        %v698 = vpack.c.b16 %v566, %v564
        %v699 = vpack.c.b16 %v569, %v567
        %v700 = vpack.c.b16 %v570, %v568
        %v701 = vpack.c.b16 %v573, %v571
        %v702 = vpack.c.b16 %v574, %v572
        %v703 = vpack.c.b16 %v577, %v575
        %v704 = vpack.c.b16 %v578, %v576
        %v705 = vpack.c.b16 %v581, %v579
        %v706 = vpack.c.b16 %v582, %v580
        %v707 = vpack.c.b16 %v585, %v583
        %v708 = vpack.c.b16 %v586, %v584
        %v709 = vpack.c.b16 %v589, %v587
        %v710 = vpack.c.b16 %v590, %v588
        %v711 = vpack.c.b16 %v593, %v591
        %v712 = vpack.c.b16 %v594, %v592
        %v713 = vpack.c.b16 %v597, %v595
        %v714 = vpack.c.b16 %v598, %v596
        %v715 = vpack.c.b16 %v601, %v599
        %v716 = vpack.c.b16 %v602, %v600
        %v717 = vpack.c.b16 %v605, %v603
        %v718 = vpack.c.b16 %v606, %v604
        %v719 = vpack.c.b16 %v609, %v607
        %v720 = vpack.c.b16 %v610, %v608
        %v721 = vpack.c.b16 %v613, %v611
        %v722 = vpack.c.b16 %v614, %v612
        %v723 = vpack.c.b16 %v617, %v615
        %v724 = vpack.c.b16 %v618, %v616
        %v725 = vpack.c.b16 %v621, %v619
        %v726 = vpack.c.b16 %v622, %v620
        %v727 = vpack.c.b16 %v625, %v623
        %v728 = vpack.c.b16 %v626, %v624
        %v729 = vpack.c.b16 %v629, %v627
        %v730 = vpack.c.b16 %v630, %v628
        %v731 = vpack.c.b16 %v633, %v631
        %v732 = vpack.c.b16 %v634, %v632
        %v733 = vpack.c.b16 %v637, %v635
        %v734 = vpack.c.b16 %v638, %v636
        %831 = vmatpush.bf16.msra.mxu0 %v653
        %832 = vmatpush.bf16.msra.mxu0 %v651
        %833 = vmatpush.bf16.msra.mxu0 %v649
        %834 = vmatpush.bf16.msra.mxu0 %v647
        %835 = vmatpush.bf16.msra.mxu0 %v645
        %836 = vmatpush.bf16.msra.mxu0 %v643
        %837 = vmatpush.bf16.msra.mxu0 %v641
        %838 = vmatpush.bf16.msra.mxu0 %v639
        %839 = vmatmul.bf16.gmra.mxu0 %v249
        %v840 = vpop.f32.mrf.mxu0
        %v841 = vadd.f32 0.0, %v840
        %v842 = vpop.f32.mrf.mxu0
        %843 = vdwg.mxu0
        %844 = vmatpush.bf16.msra.mxu0 %v669
        %845 = vmatpush.bf16.msra.mxu0 %v667
        %846 = vmatpush.bf16.msra.mxu0 %v665
        %847 = vmatpush.bf16.msra.mxu0 %v663
        %848 = vmatpush.bf16.msra.mxu0 %v661
        %849 = vmatpush.bf16.msra.mxu0 %v659
        %850 = vmatpush.bf16.msra.mxu0 %v657
        %851 = vmatpush.bf16.msra.mxu0 %v655
        %852 = vmatmul.bf16.gmra.mxu0 %v250
        %v853 = vpop.f32.mrf.mxu0
        %v854 = vadd.f32 %v841, %v853
        %v855 = vpop.f32.mrf.mxu0
        %856 = vdwg.mxu0
        %857 = vmatpush.bf16.msra.mxu0 %v685
        %858 = vmatpush.bf16.msra.mxu0 %v683
        %859 = vmatpush.bf16.msra.mxu0 %v681
        %860 = vmatpush.bf16.msra.mxu0 %v679
        %861 = vmatpush.bf16.msra.mxu0 %v677
        %862 = vmatpush.bf16.msra.mxu0 %v675
        %863 = vmatpush.bf16.msra.mxu0 %v673
        %864 = vmatpush.bf16.msra.mxu0 %v671
        %865 = vmatmul.bf16.gmra.mxu0 %v251
        %v866 = vpop.f32.mrf.mxu0
        %v867 = vadd.f32 %v854, %v866
        %v868 = vpop.f32.mrf.mxu0
        %869 = vdwg.mxu0
        %870 = vmatpush.bf16.msra.mxu0 %v701
        %871 = vmatpush.bf16.msra.mxu0 %v699
        %872 = vmatpush.bf16.msra.mxu0 %v697
        %873 = vmatpush.bf16.msra.mxu0 %v695
        %874 = vmatpush.bf16.msra.mxu0 %v693
        %875 = vmatpush.bf16.msra.mxu0 %v691
        %876 = vmatpush.bf16.msra.mxu0 %v689
        %877 = vmatpush.bf16.msra.mxu0 %v687
        %878 = vmatmul.bf16.gmra.mxu0 %v252
        %v879 = vpop.f32.mrf.mxu0
        %v880 = vadd.f32 %v867, %v879
        %v881 = vpop.f32.mrf.mxu0
        %882 = vdwg.mxu0
        %883 = vmatpush.bf16.msra.mxu0 %v717
        %884 = vmatpush.bf16.msra.mxu0 %v715
        %885 = vmatpush.bf16.msra.mxu0 %v713
        %886 = vmatpush.bf16.msra.mxu0 %v711
        %887 = vmatpush.bf16.msra.mxu0 %v709
        %888 = vmatpush.bf16.msra.mxu0 %v707
        %889 = vmatpush.bf16.msra.mxu0 %v705
        %890 = vmatpush.bf16.msra.mxu0 %v703
        %891 = vmatmul.bf16.gmra.mxu0 %v253
        %v892 = vpop.f32.mrf.mxu0
        %v893 = vadd.f32 %v880, %v892
        %v894 = vpop.f32.mrf.mxu0
        %895 = vdwg.mxu0
        %896 = vmatpush.bf16.msra.mxu0 %v733
        %897 = vmatpush.bf16.msra.mxu0 %v731
        %898 = vmatpush.bf16.msra.mxu0 %v729
        %899 = vmatpush.bf16.msra.mxu0 %v727
        %900 = vmatpush.bf16.msra.mxu0 %v725
        %901 = vmatpush.bf16.msra.mxu0 %v723
        %902 = vmatpush.bf16.msra.mxu0 %v721
        %903 = vmatpush.bf16.msra.mxu0 %v719
        %904 = vmatmul.bf16.gmra.mxu0 %v254
        %v905 = vpop.f32.mrf.mxu0
        %v906 = vadd.f32 %v893, %v905
        %v907 = vpop.f32.mrf.mxu0
        %908 = vdwg.mxu0
        %909 = vmatpush.bf16.msra.mxu0 %v654
        %910 = vmatpush.bf16.msra.mxu0 %v652
        %911 = vmatpush.bf16.msra.mxu0 %v650
        %912 = vmatpush.bf16.msra.mxu0 %v648
        %913 = vmatpush.bf16.msra.mxu0 %v646
        %914 = vmatpush.bf16.msra.mxu0 %v644
        %915 = vmatpush.bf16.msra.mxu0 %v642
        %916 = vmatpush.bf16.msra.mxu0 %v640
        %917 = vmatmul.bf16.gmra.mxu0 %v249
        %v918 = vpop.f32.mrf.mxu0
        %v919 = vadd.f32 0.0, %v918
        %v920 = vpop.f32.mrf.mxu0
        %921 = vdwg.mxu0
        %922 = vmatpush.bf16.msra.mxu0 %v670
        %923 = vmatpush.bf16.msra.mxu0 %v668
        %924 = vmatpush.bf16.msra.mxu0 %v666
        %925 = vmatpush.bf16.msra.mxu0 %v664
        %926 = vmatpush.bf16.msra.mxu0 %v662
        %927 = vmatpush.bf16.msra.mxu0 %v660
        %928 = vmatpush.bf16.msra.mxu0 %v658
        %929 = vmatpush.bf16.msra.mxu0 %v656
        %930 = vmatmul.bf16.gmra.mxu0 %v250
        %v931 = vpop.f32.mrf.mxu0
        %v932 = vadd.f32 %v919, %v931
        %v933 = vpop.f32.mrf.mxu0
        %934 = vdwg.mxu0
        %935 = vmatpush.bf16.msra.mxu0 %v686
        %936 = vmatpush.bf16.msra.mxu0 %v684
        %937 = vmatpush.bf16.msra.mxu0 %v682
        %938 = vmatpush.bf16.msra.mxu0 %v680
        %939 = vmatpush.bf16.msra.mxu0 %v678
        %940 = vmatpush.bf16.msra.mxu0 %v676
        %941 = vmatpush.bf16.msra.mxu0 %v674
        %942 = vmatpush.bf16.msra.mxu0 %v672
        %943 = vmatmul.bf16.gmra.mxu0 %v251
        %v944 = vpop.f32.mrf.mxu0
        %v945 = vadd.f32 %v932, %v944
        %v946 = vpop.f32.mrf.mxu0
        %947 = vdwg.mxu0
        %948 = vmatpush.bf16.msra.mxu0 %v702
        %949 = vmatpush.bf16.msra.mxu0 %v700
        %950 = vmatpush.bf16.msra.mxu0 %v698
        %951 = vmatpush.bf16.msra.mxu0 %v696
        %952 = vmatpush.bf16.msra.mxu0 %v694
        %953 = vmatpush.bf16.msra.mxu0 %v692
        %954 = vmatpush.bf16.msra.mxu0 %v690
        %955 = vmatpush.bf16.msra.mxu0 %v688
        %956 = vmatmul.bf16.gmra.mxu0 %v252
        %v957 = vpop.f32.mrf.mxu0
        %v958 = vadd.f32 %v945, %v957
        %v959 = vpop.f32.mrf.mxu0
        %960 = vdwg.mxu0
        %961 = vmatpush.bf16.msra.mxu0 %v718
        %962 = vmatpush.bf16.msra.mxu0 %v716
        %963 = vmatpush.bf16.msra.mxu0 %v714
        %964 = vmatpush.bf16.msra.mxu0 %v712
        %965 = vmatpush.bf16.msra.mxu0 %v710
        %966 = vmatpush.bf16.msra.mxu0 %v708
        %967 = vmatpush.bf16.msra.mxu0 %v706
        %968 = vmatpush.bf16.msra.mxu0 %v704
        %969 = vmatmul.bf16.gmra.mxu0 %v253
        %v970 = vpop.f32.mrf.mxu0
        %v971 = vadd.f32 %v958, %v970
        %v972 = vpop.f32.mrf.mxu0
        %973 = vdwg.mxu0
        %974 = vmatpush.bf16.msra.mxu0 %v734
        %975 = vmatpush.bf16.msra.mxu0 %v732
        %976 = vmatpush.bf16.msra.mxu0 %v730
        %977 = vmatpush.bf16.msra.mxu0 %v728
        %978 = vmatpush.bf16.msra.mxu0 %v726
        %979 = vmatpush.bf16.msra.mxu0 %v724
        %980 = vmatpush.bf16.msra.mxu0 %v722
        %981 = vmatpush.bf16.msra.mxu0 %v720
        %982 = vmatmul.bf16.gmra.mxu0 %v254
        %v983 = vpop.f32.mrf.mxu0
        %v984 = vadd.f32 %v971, %v983
        %v985 = vpop.f32.mrf.mxu0
        %986 = vdwg.mxu0
        %v987 = vrot.slane %v906, 4
        %v988 = vadd.f32 %v906, %v987
        %v989 = vrot.slane %v988, 2
        %v990 = vadd.f32 %v988, %v989
        %v991 = vrot.slane %v990, 1
        %v992 = vadd.f32 %v990, %v991
        %v993 = vrot.slane %v984, 4
        %v994 = vadd.f32 %v984, %v993
        %v995 = vrot.slane %v994, 2
        %v996 = vadd.f32 %v994, %v995
        %v997 = vrot.slane %v996, 1
        %v998 = vadd.f32 %v996, %v997
        %v999 = vmul.f32 %v906, %v906
        %v1000 = vmul.f32 %v984, %v984
        %v1001 = vrot.slane %v999, 4
        %v1002 = vadd.f32 %v999, %v1001
        %v1003 = vrot.slane %v1002, 2
        %v1004 = vadd.f32 %v1002, %v1003
        %v1005 = vrot.slane %v1004, 1
        %v1006 = vadd.f32 %v1004, %v1005
        %v1007 = vrot.slane %v1000, 4
        %v1008 = vadd.f32 %v1000, %v1007
        %v1009 = vrot.slane %v1008, 2
        %v1010 = vadd.f32 %v1008, %v1009
        %v1011 = vrot.slane %v1010, 1
        %v1012 = vadd.f32 %v1010, %v1011
        %v1013 = vmul.f32 %v992, 0.125
        %v1014 = vmul.f32 %v998, 0.125
        %v1015 = vmul.f32 %v1006, 0.125
        %v1016 = vmul.f32 %v1012, 0.125
        %v1017 = vmul.f32 %v1013, %v1013
        %v1018 = vmul.f32 %v1014, %v1014
        %v1019 = vsub.f32 %v1015, %v1017
        %v1020 = vsub.f32 %v1016, %v1018
        %v1021 = vmax.f32 %v1019, 0.0
        %v1022 = vmax.f32 %v1020, 0.0
        %v1023 = vadd.f32 %v1021, 1e-05
        %v1024 = vadd.f32 %v1022, 1e-05
        %v1025 = vrsqrt.pop %v1023
        %v1026 = vmul.f32 %v1025, %v1023
        %v1027 = vmul.f32 %v1026, %v1025
        %v1028 = vmul.f32 0.5, %v1027
        %v1029 = vsub.f32 1.5, %v1028
        %v1030 = vmul.f32 %v1025, %v1029
        %vm1031 = vweird.f32 %v1023
        %vm1032 = vweird.f32 %v1025
        %vm1033 = vmor %vm1031, %vm1032
        %v1034 = vsel %vm1033, %v1025, %v1030
        %v1035 = vrsqrt.pop %v1024
        %v1036 = vmul.f32 %v1035, %v1024
        %v1037 = vmul.f32 %v1036, %v1035
        %v1038 = vmul.f32 0.5, %v1037
        %v1039 = vsub.f32 1.5, %v1038
        %v1040 = vmul.f32 %v1035, %v1039
        %vm1041 = vweird.f32 %v1024
        %vm1042 = vweird.f32 %v1035
        %vm1043 = vmor %vm1041, %vm1042
        %v1044 = vsel %vm1043, %v1035, %v1040
        %v1047 = vrot.slane %v1044, 7
        %vm1048 = vcmask 1040384
        %v1049 = vsel %vm1048, %v1034, %v1047
        %v1051 = vmul.f32 %v238, %v1049
        %v1053 = vperm.slane %v1051, 0
        %v1054 = vperm.slane %v1051, 1
        %v1057 = vmul.f32 %v1013, %v1053
        %v1058 = vmul.f32 %v1014, %v1054
        %v1061 = vrot.slane %v1058, 7
        %v1062 = vsel %vm1048, %v1057, %v1061
        %v1064 = vsub.f32 %v239, %v1062
        %v1065 = vmul.f32 %v906, %v1053
        %v1066 = vmul.f32 %v984, %v1054
        %v1068 = vperm.slane %v1064, 0
        %v1069 = vperm.slane %v1064, 1
        %v1072 = vadd.f32 %v1065, %v1068
        %v1073 = vadd.f32 %v1066, %v1069
        %v1074 = vmax.f32 %v1072, 0.0
        %v1075 = vmax.f32 %v1073, 0.0
        %v1076 = vpack.c.bf16 %v1074, %v1074
        %v1077 = vpack.c.bf16 %v1075, %v1075
        %v1078 = vld [vmem:[%s2] sm:$0xf]
        %v1079 = vld [vmem:[%s2 + $0x4] sm:$0xf]
        %v1080 = vld [vmem:[%s2 + $0x8] sm:$0xf]
        %v1081 = vld [vmem:[%s2 + $0xc] sm:$0xf]
        %v1082 = vld [vmem:[%s2 + $0x10] sm:$0xf]
        %v1083 = vld [vmem:[%s2 + $0x14] sm:$0xf]
        %v1084 = vld [vmem:[%s2 + $0x18] sm:$0xf]
        %v1085 = vld [vmem:[%s2 + $0x1c] sm:$0xf]
        %v1086 = vld [vmem:[%s2 + $0x20] sm:$0xf]
        %v1087 = vld [vmem:[%s2 + $0x24] sm:$0xf]
        %v1088 = vld [vmem:[%s2 + $0x28] sm:$0xf]
        %v1089 = vld [vmem:[%s2 + $0x2c] sm:$0xf]
        %v1090 = vld [vmem:[%s2 + $0x30] sm:$0xf]
        %v1091 = vld [vmem:[%s2 + $0x34] sm:$0xf]
        %v1092 = vld [vmem:[%s2 + $0x38] sm:$0xf]
        %v1093 = vld [vmem:[%s2 + $0x3c] sm:$0xf]
        %v1094 = vld [vmem:[%s2 + $0x40] sm:$0xf]
        %v1095 = vld [vmem:[%s2 + $0x44] sm:$0xf]
        %v1096 = vld [vmem:[%s2 + $0x48] sm:$0xf]
        %v1097 = vld [vmem:[%s2 + $0x4c] sm:$0xf]
        %v1098 = vld [vmem:[%s2 + $0x50] sm:$0xf]
        %v1099 = vld [vmem:[%s2 + $0x54] sm:$0xf]
        %v1100 = vld [vmem:[%s2 + $0x58] sm:$0xf]
        %v1101 = vld [vmem:[%s2 + $0x5c] sm:$0xf]
        %v1102 = vld [vmem:[%s2 + $0x60] sm:$0xf]
        %v1103 = vld [vmem:[%s2 + $0x64] sm:$0xf]
        %v1104 = vld [vmem:[%s2 + $0x68] sm:$0xf]
        %v1105 = vld [vmem:[%s2 + $0x6c] sm:$0xf]
        %v1106 = vld [vmem:[%s2 + $0x70] sm:$0xf]
        %v1107 = vld [vmem:[%s2 + $0x74] sm:$0xf]
        %v1108 = vld [vmem:[%s2 + $0x78] sm:$0xf]
        %v1109 = vld [vmem:[%s2 + $0x7c] sm:$0xf]
        %v1142 = vunpack.c.l.b16 %v1078
        %v1143 = vunpack.c.l.b16 %v1079
        %v1144 = vunpack.c.l.b16 %v1080
        %v1145 = vunpack.c.l.b16 %v1081
        %v1146 = vunpack.c.l.b16 %v1082
        %v1147 = vunpack.c.l.b16 %v1083
        %v1148 = vunpack.c.l.b16 %v1084
        %v1149 = vunpack.c.l.b16 %v1085
        %v1150 = vunpack.c.l.b16 %v1086
        %v1151 = vunpack.c.l.b16 %v1087
        %v1152 = vunpack.c.l.b16 %v1088
        %v1153 = vunpack.c.l.b16 %v1089
        %v1154 = vunpack.c.l.b16 %v1090
        %v1155 = vunpack.c.l.b16 %v1091
        %v1156 = vunpack.c.l.b16 %v1092
        %v1157 = vunpack.c.l.b16 %v1093
        %v1158 = vunpack.c.l.b16 %v1094
        %v1159 = vunpack.c.l.b16 %v1095
        %v1160 = vunpack.c.l.b16 %v1096
        %v1161 = vunpack.c.l.b16 %v1097
        %v1162 = vunpack.c.l.b16 %v1098
        %v1163 = vunpack.c.l.b16 %v1099
        %v1164 = vunpack.c.l.b16 %v1100
        %v1165 = vunpack.c.l.b16 %v1101
        %v1166 = vunpack.c.l.b16 %v1102
        %v1167 = vunpack.c.l.b16 %v1103
        %v1168 = vunpack.c.l.b16 %v1104
        %v1169 = vunpack.c.l.b16 %v1105
        %v1170 = vunpack.c.l.b16 %v1106
        %v1171 = vunpack.c.l.b16 %v1107
        %v1172 = vunpack.c.l.b16 %v1108
        %v1173 = vunpack.c.l.b16 %v1109
        %v1174 = vpack.c.b16 %v1143, %v1142
        %v1175 = vpack.c.b16 %v1145, %v1144
        %v1176 = vpack.c.b16 %v1147, %v1146
        %v1177 = vpack.c.b16 %v1149, %v1148
        %v1178 = vpack.c.b16 %v1151, %v1150
        %v1179 = vpack.c.b16 %v1153, %v1152
        %v1180 = vpack.c.b16 %v1155, %v1154
        %v1181 = vpack.c.b16 %v1157, %v1156
        %v1182 = vpack.c.b16 %v1159, %v1158
        %v1183 = vpack.c.b16 %v1161, %v1160
        %v1184 = vpack.c.b16 %v1163, %v1162
        %v1185 = vpack.c.b16 %v1165, %v1164
        %v1186 = vpack.c.b16 %v1167, %v1166
        %v1187 = vpack.c.b16 %v1169, %v1168
        %v1188 = vpack.c.b16 %v1171, %v1170
        %v1189 = vpack.c.b16 %v1173, %v1172
        %1206 = vmatpush.bf16.msra.mxu0 %v1181
        %1207 = vmatpush.bf16.msra.mxu0 %v1180
        %1208 = vmatpush.bf16.msra.mxu0 %v1179
        %1209 = vmatpush.bf16.msra.mxu0 %v1178
        %1210 = vmatpush.bf16.msra.mxu0 %v1177
        %1211 = vmatpush.bf16.msra.mxu0 %v1176
        %1212 = vmatpush.bf16.msra.mxu0 %v1175
        %1213 = vmatpush.bf16.msra.mxu0 %v1174
        %1214 = vmatmul.bf16.gmra.mxu0 %v1076
        %v1215 = vpop.f32.mrf.mxu0
        %v1216 = vadd.f32 0.0, %v1215
        %v1217 = vpop.f32.mrf.mxu0
        %1218 = vdwg.mxu0
        %1219 = vmatpush.bf16.msra.mxu0 %v1189
        %1220 = vmatpush.bf16.msra.mxu0 %v1188
        %1221 = vmatpush.bf16.msra.mxu0 %v1187
        %1222 = vmatpush.bf16.msra.mxu0 %v1186
        %1223 = vmatpush.bf16.msra.mxu0 %v1185
        %1224 = vmatpush.bf16.msra.mxu0 %v1184
        %1225 = vmatpush.bf16.msra.mxu0 %v1183
        %1226 = vmatpush.bf16.msra.mxu0 %v1182
        %1227 = vmatmul.bf16.gmra.mxu0 %v1077
        %v1228 = vpop.f32.mrf.mxu0
        %v1229 = vadd.f32 %v1216, %v1228
        %v1230 = vpop.f32.mrf.mxu0
        %1231 = vdwg.mxu0
        %v1232 = vrot.slane %v1229, 4
        %v1233 = vadd.f32 %v1229, %v1232
        %v1234 = vrot.slane %v1233, 2
        %v1235 = vadd.f32 %v1233, %v1234
        %v1236 = vrot.slane %v1235, 1
        %v1237 = vadd.f32 %v1235, %v1236
        %v1238 = vmul.f32 %v1229, %v1229
        %v1239 = vrot.slane %v1238, 4
        %v1240 = vadd.f32 %v1238, %v1239
        %v1241 = vrot.slane %v1240, 2
        %v1242 = vadd.f32 %v1240, %v1241
        %v1243 = vrot.slane %v1242, 1
        %v1244 = vadd.f32 %v1242, %v1243
        %v1245 = vmul.f32 %v1237, 0.125
        %v1246 = vmul.f32 %v1244, 0.125
        %v1247 = vmul.f32 %v1245, %v1245
        %v1248 = vsub.f32 %v1246, %v1247
        %v1249 = vmax.f32 %v1248, 0.0
        %v1250 = vadd.f32 %v1249, 1e-05
        %v1251 = vrsqrt.pop %v1250
        %v1252 = vmul.f32 %v1251, %v1250
        %v1253 = vmul.f32 %v1252, %v1251
        %v1254 = vmul.f32 0.5, %v1253
        %v1255 = vsub.f32 1.5, %v1254
        %v1256 = vmul.f32 %v1251, %v1255
        %vm1257 = vweird.f32 %v1250
        %vm1258 = vweird.f32 %v1251
        %vm1259 = vmor %vm1257, %vm1258
        %v1260 = vsel %vm1259, %v1251, %v1256
        %v1261 = vmul.f32 %v240, %v1260
        %v1262 = vmul.f32 %v1245, %v1261
        %v1263 = vsub.f32 %v241, %v1262
        %v1265 = vperm.slane %v1261, 0
        %v1267 = vmul.f32 %v1229, %v1265
        %v1269 = vperm.slane %v1263, 0
        %v1271 = vadd.f32 %v1267, %v1269
        %v1272 = vmax.f32 %v1271, 0.0
        %v1273 = vpack.c.bf16 %v1272, %v1272
        %v1274 = vld [vmem:[%s3] sm:$0xf]
        %v1275 = vld [vmem:[%s3 + $0x4] sm:$0xf]
        %v1276 = vld [vmem:[%s3 + $0x8] sm:$0xf]
        %v1277 = vld [vmem:[%s3 + $0xc] sm:$0xf]
        %v1278 = vld [vmem:[%s3 + $0x10] sm:$0xf]
        %v1279 = vld [vmem:[%s3 + $0x14] sm:$0xf]
        %v1280 = vld [vmem:[%s3 + $0x18] sm:$0xf]
        %v1281 = vld [vmem:[%s3 + $0x1c] sm:$0xf]
        %v1282 = vld [vmem:[%s3 + $0x20] sm:$0xf]
        %v1283 = vld [vmem:[%s3 + $0x24] sm:$0xf]
        %v1284 = vld [vmem:[%s3 + $0x28] sm:$0xf]
        %v1285 = vld [vmem:[%s3 + $0x2c] sm:$0xf]
        %v1286 = vld [vmem:[%s3 + $0x30] sm:$0xf]
        %v1287 = vld [vmem:[%s3 + $0x34] sm:$0xf]
        %v1288 = vld [vmem:[%s3 + $0x38] sm:$0xf]
        %v1289 = vld [vmem:[%s3 + $0x3c] sm:$0xf]
        %v1291 = vperm.slane %v242, 0
        %v1309 = vunpack.c.l.b16 %v1274
        %v1310 = vunpack.c.l.b16 %v1275
        %v1311 = vunpack.c.l.b16 %v1276
        %v1312 = vunpack.c.l.b16 %v1277
        %v1313 = vunpack.c.l.b16 %v1278
        %v1314 = vunpack.c.l.b16 %v1279
        %v1315 = vunpack.c.l.b16 %v1280
        %v1316 = vunpack.c.l.b16 %v1281
        %v1317 = vunpack.c.l.b16 %v1282
        %v1318 = vunpack.c.l.b16 %v1283
        %v1319 = vunpack.c.l.b16 %v1284
        %v1320 = vunpack.c.l.b16 %v1285
        %v1321 = vunpack.c.l.b16 %v1286
        %v1322 = vunpack.c.l.b16 %v1287
        %v1323 = vunpack.c.l.b16 %v1288
        %v1324 = vunpack.c.l.b16 %v1289
        %v1325 = vpack.c.b16 %v1310, %v1309
        %v1326 = vpack.c.b16 %v1312, %v1311
        %v1327 = vpack.c.b16 %v1314, %v1313
        %v1328 = vpack.c.b16 %v1316, %v1315
        %v1329 = vpack.c.b16 %v1318, %v1317
        %v1330 = vpack.c.b16 %v1320, %v1319
        %v1331 = vpack.c.b16 %v1322, %v1321
        %v1332 = vpack.c.b16 %v1324, %v1323
        %1341 = vmatpush.bf16.msra.mxu0 %v1332
        %1342 = vmatpush.bf16.msra.mxu0 %v1331
        %1343 = vmatpush.bf16.msra.mxu0 %v1330
        %1344 = vmatpush.bf16.msra.mxu0 %v1329
        %1345 = vmatpush.bf16.msra.mxu0 %v1328
        %1346 = vmatpush.bf16.msra.mxu0 %v1327
        %1347 = vmatpush.bf16.msra.mxu0 %v1326
        %1348 = vmatpush.bf16.msra.mxu0 %v1325
        %1349 = vmatmul.bf16.gmra.mxu0 %v1273
        %v1350 = vpop.f32.mrf.mxu0
        %v1351 = vadd.f32 %v1291, %v1350
        %v1352 = vpop.f32.mrf.mxu0
        %1353 = vdwg.mxu0
        %1354 = vst [vmem:[%s237] sm:$0xff] %v1351
        %p1355 = scmp.lt.s32.totalorder %s17, 3
        %s1356 = scalar_select %p1355, %s17, 3
        %s1357 = smul.addr %s1356, 8
        %s1358 = scalar_lea.vmem %s5, %s1357
        // Predicated region
        $region45: #{smallfcn_forward.1} parent=39 // pred_check
          %p1359 = pneg %p145
        $region46: #{smallfcn_forward.1} parent=39 // pred_check_branch
          %1361 = sbr.rel (%p1359) target = $region48
        $region47: #{smallfcn_forward.1} parent=39 // pred_region
          _
        $region48: #{smallfcn_forward.1} parent=39 // pred_fallthru
          _
      $region40: #{smallfcn_forward.1} parent=5 // pred_fallthru
        _
      %p1362 = scmp.le.s32.totalorder 2, %s12
      // Predicated region
      $region49: #{smallfcn_forward.1} parent=5 // pred_check
        %p1363 = pneg %p1362
      $region50: #{smallfcn_forward.1} parent=5 // pred_check_branch
        %1365 = sbr.rel (%p1363) target = $region52
      $region51: #{smallfcn_forward.1} parent=5 // pred_region
        %s1366 = ssub.s32 %s12, 2
        // Predicated region
        $region53: #{smallfcn_forward.1} parent=51 // pred_check
          %p1367 = pneg %p151
        $region54: #{smallfcn_forward.1} parent=51 // pred_check_branch
          %1369 = sbr.rel (%p1367) target = $region56
        $region55: #{smallfcn_forward.1} parent=51 // pred_region
          %p1370 = scmp.lt.s32.totalorder %s18, 3
          %s1371 = scalar_select %p1370, %s18, 3
          %s1372 = smul.addr %s1371, 8
          %s1373 = scalar_lea.vmem %s5, %s1372
        $region56: #{smallfcn_forward.1} parent=51 // pred_fallthru
          _
      $region52: #{smallfcn_forward.1} parent=5 // pred_fallthru
        _
    $region6: #{smallfcn_forward.1} parent=1 // loop_footer
      %s16 = sadd.s32 1, %s12
    $region7: #{smallfcn_forward.1} parent=1 // loop_footer_branch
      %11 = sbr.rel target = $region3
    $region8: #{smallfcn_forward.1} parent=1 // loop_exit
      _
    %1374 = vsyncpa [#allocation3], 1
    %s1375 = scalar_lea.sflag [#allocation3], 1
    %1376 = vsyncpa %s1375, 1

</llo_original>
